<compile_context>
chip_gen: v6e
topology: v6e:2x2x1
jax: 0.10.0
libtpu: 0.0.40
codegen_flags: <defaults>
</compile_context>

<pallas_src>
import functools

import jax
import jax.numpy as jnp
from jax.experimental import pallas as pl
from jax.experimental.pallas import tpu as pltpu


def _round_up(x, m):
    return ((x + m - 1) // m) * m


def _cdiv(a, b):
    return -(-a // b)


def _choose_batch_tiling(B, tile_b):
    """Balanced batch tiling on the lane axis.

    Tiles are multiples of 128 lanes, at most tile_b wide, padding is bounded by
    <128 columns per tile, and there are >=2 grid steps whenever B >= 256 (so the
    'parallel' axis can shard across both v7x TensorCores)."""
    B128 = _round_up(max(B, 1), 128)
    tile_b = _round_up(max(tile_b, 128), 128)
    n = max(_cdiv(B128, tile_b),          # respect the tile-size cap
            min(2, B128 // 128))          # >=2 steps for megacore when B >= 256
    tb = _round_up(_cdiv(B128, n), 128)   # balanced tile size
    n = _cdiv(B128, tb)
    return tb, n


def fc_net_kernel(xT_ref, w1_ref, w2_ref, b2_ref, oT_ref):
    # xT : (in_C+1, TB) bf16  -- batch on lanes; last row is all-ones (carries b1)
    # w1 : (H, in_C+1)  bf16  -- PyTorch (out,in) layout with b1 appended as a column
    # w2 : (out_C, H)   bf16
    # b2 : (out_C, 1)   f32
    # oT : (out_C, TB)  f32
    h = jnp.maximum(
        jnp.dot(w1_ref[...], xT_ref[...], preferred_element_type=jnp.float32),
        0.0)                                                     # (H, TB), bias via ones-row
    o = jnp.dot(w2_ref[...], h.astype(jnp.bfloat16),
                preferred_element_type=jnp.float32)              # (out_C, TB)
    oT_ref[...] = (o + b2_ref[...]).astype(oT_ref.dtype)


@functools.partial(jax.jit, static_argnames=("tile_b",))
def fc_net_forward(x, w1, b1, w2, b2, *, tile_b=32768):
    """x: (B, in_C) f32.  w1: (H, in_C), b1: (H,), w2: (out_C, H), b2: (out_C,).
    Returns (B, out_C) f32 == relu(x @ w1.T + b1) @ w2.T + b2
    (bf16 matmul operands / bf16-rounded b1, f32 accumulation)."""
    B, in_C = x.shape
    H = w1.shape[0]
    out_C = w2.shape[0]

    tb, n = _choose_batch_tiling(B, tile_b)
    B_pad = n * tb
    K = in_C + 1  # augmented contraction dim (ones-row carries b1)

    # Single fused relayout pass over x: bf16 cast + ones-row append + transpose + pad.
    ones = jnp.ones((B, 1), jnp.bfloat16)
    x_aug = jnp.concatenate([x.astype(jnp.bfloat16), ones], axis=1)   # (B, K)
    xT = jnp.transpose(x_aug)                                         # (K, B) lane-dense
    if B_pad != B:
        xT = jnp.pad(xT, ((0, 0), (0, B_pad - B)))

    # Fold b1 into W1 as an extra (bf16) column; weights stay in PyTorch (out,in) layout.
    w1_aug = jnp.concatenate(
        [w1.astype(jnp.bfloat16), b1.reshape(H, 1).astype(jnp.bfloat16)], axis=1)  # (H, K)

    # Scale the VMEM limit with the tile (default tile -> 32 MiB, safe on every chip).
    vmem_limit = int(min(96 * 1024 * 1024, max(32 * 1024 * 1024, 768 * tb)))

    oT = pl.pallas_call(
        fc_net_kernel,
        out_shape=jax.ShapeDtypeStruct((out_C, B_pad), jnp.float32),
        grid_spec=pltpu.PrefetchScalarGridSpec(
            num_scalar_prefetch=0,
            grid=(n,),
            in_specs=[
                pl.BlockSpec((K, tb), lambda i: (0, i)),        # x tile, pipelined
                pl.BlockSpec((H, K), lambda i: (0, 0)),         # weights resident in VMEM
                pl.BlockSpec((out_C, H), lambda i: (0, 0)),
                pl.BlockSpec((out_C, 1), lambda i: (0, 0)),
            ],
            out_specs=pl.BlockSpec((out_C, tb), lambda i: (0, i)),
        ),
        compiler_params=pltpu.CompilerParams(
            dimension_semantics=("parallel",),    # shard batch tiles over TCs on v7x
            vmem_limit_bytes=vmem_limit,
        ),
    )(
        xT,
        w1_aug,
        w2.astype(jnp.bfloat16),
        b2.reshape(out_C, 1).astype(jnp.float32),
    )
    return jnp.transpose(oT[:, :B])


def init_fc_net_params(key, in_C, out_C, hidden=32):
    """Deterministic init mimicking torch.nn.Linear (uniform +/-1/sqrt(fan_in)),
    stored in PyTorch layout (out_features, in_features)."""
    k1, k2, k3, k4 = jax.random.split(key, 4)
    bound1 = 1.0 / jnp.sqrt(jnp.float32(in_C))
    bound2 = 1.0 / jnp.sqrt(jnp.float32(hidden))
    w1 = jax.random.uniform(k1, (hidden, in_C), jnp.float32, -bound1, bound1)
    b1 = jax.random.uniform(k2, (hidden,), jnp.float32, -bound1, bound1)
    w2 = jax.random.uniform(k3, (out_C, hidden), jnp.float32, -bound2, bound2)
    b2 = jax.random.uniform(k4, (out_C,), jnp.float32, -bound2, bound2)
    return w1, b1, w2, b2


if __name__ == "__main__":
    # CartPole-style shapes: observation dim 4, 2 actions, small batch.
    B, in_C, out_C = 8, 4, 2
    key = jax.random.PRNGKey(0)
    kx, kp = jax.random.split(key)
    x = jax.random.normal(kx, (B, in_C), jnp.float32)
    w1, b1, w2, b2 = init_fc_net_params(kp, in_C, out_C)

    out = jax.block_until_ready(fc_net_forward(x, w1, b1, w2, b2))
    assert out.shape == (B, out_C)

    # Reference with matching semantics: bf16 operands (incl. bf16-rounded b1),
    # f32 accumulation, f32 b2 add.
    x_bf = x.astype(jnp.bfloat16)
    w1_bf = w1.astype(jnp.bfloat16)
    b1_bf = b1.astype(jnp.bfloat16).astype(jnp.float32)
    h_ref = jnp.maximum(
        jnp.dot(x_bf, w1_bf.T, preferred_element_type=jnp.float32) + b1_bf, 0.0)
    ref_bf16 = jnp.dot(h_ref.astype(jnp.bfloat16), w2.astype(jnp.bfloat16).T,
                       preferred_element_type=jnp.float32) + b2
    assert jnp.allclose(out, ref_bf16, atol=1e-4, rtol=1e-4)

    # Loose sanity check vs. full-f32 PyTorch semantics (bf16 operand rounding).
    ref_f32 = jnp.maximum(x @ w1.T + b1, 0.0) @ w2.T + b2
    assert jnp.allclose(out, ref_f32, atol=5e-2, rtol=5e-2)

    # Exercise a multi-tile / padded grid once as well (balanced tiling path).
    B2 = 300
    x2 = jax.random.normal(jax.random.PRNGKey(1), (B2, in_C), jnp.float32)
    out2 = jax.block_until_ready(fc_net_forward(x2, w1, b1, w2, b2, tile_b=128))
    ref2 = jnp.maximum(x2 @ w1.T + b1, 0.0) @ w2.T + b2
    assert out2.shape == (B2, out_C)
    assert jnp.allclose(out2, ref2, atol=5e-2, rtol=5e-2)

    print("KERNEL_OK")
</pallas_src>

<mosaic_0001>
module attributes {stable_mosaic.version = 11 : i64} {
  func.func @fc_net_kernel(%arg0: i32, %arg1: memref<5x128xbf16, #tpu.memory_space<vmem>>, %arg2: memref<32x5xbf16, #tpu.memory_space<vmem>>, %arg3: memref<2x32xbf16, #tpu.memory_space<vmem>>, %arg4: memref<2x1xf32, #tpu.memory_space<vmem>>, %arg5: memref<2x128xf32, #tpu.memory_space<vmem>>) attributes {dimension_semantics = [#tpu.dimension_semantics<parallel>], iteration_bounds = array<i64: 1>, scalar_prefetch = 0 : i64, scratch_operands = 0 : i64, tpu.core_type = #tpu.core_type<tc>, window_params = [{transform_indices = @transform_0, window_bounds = array<i64: 5, 128>}, {pipeline_mode = #tpu.pipeline_mode<synchronous>, transform_indices = @transform_1, window_bounds = array<i64: 32, 5>}, {pipeline_mode = #tpu.pipeline_mode<synchronous>, transform_indices = @transform_2, window_bounds = array<i64: 2, 32>}, {pipeline_mode = #tpu.pipeline_mode<synchronous>, transform_indices = @transform_3, window_bounds = array<i64: 2, 1>}, {transform_indices = @transform_4, window_bounds = array<i64: 2, 128>}]} {
    %c0 = arith.constant 0 : index
    %c0_0 = arith.constant 0 : index
    %0 = vector.load %arg2[%c0, %c0_0] : memref<32x5xbf16, #tpu.memory_space<vmem>>, vector<32x5xbf16>
    %c0_1 = arith.constant 0 : index
    %c0_2 = arith.constant 0 : index
    %1 = vector.load %arg1[%c0_1, %c0_2] : memref<5x128xbf16, #tpu.memory_space<vmem>>, vector<5x128xbf16>
    %cst = arith.constant dense<0.000000e+00> : vector<32x128xf32>
    %2 = tpu.matmul %0, %1, %cst {dimension_numbers = #tpu.dot_dimension_numbers<[1], [0], [0], [1], [0, 0, 1, 1], [], []>} : vector<32x5xbf16>, vector<5x128xbf16>, vector<32x128xf32> -> vector<32x128xf32>
    %cst_3 = arith.constant 0.000000e+00 : f32
    %3 = vector.broadcast %cst_3 : f32 to vector<32x128xf32>
    %4 = arith.maximumf %2, %3 : vector<32x128xf32>
    %c0_4 = arith.constant 0 : index
    %c0_5 = arith.constant 0 : index
    %5 = vector.load %arg3[%c0_4, %c0_5] : memref<2x32xbf16, #tpu.memory_space<vmem>>, vector<2x32xbf16>
    %6 = arith.truncf %4 : vector<32x128xf32> to vector<32x128xbf16>
    %cst_6 = arith.constant dense<0.000000e+00> : vector<2x128xf32>
    %7 = tpu.matmul %5, %6, %cst_6 {dimension_numbers = #tpu.dot_dimension_numbers<[1], [0], [0], [1], [0, 0, 1, 1], [], []>} : vector<2x32xbf16>, vector<32x128xbf16>, vector<2x128xf32> -> vector<2x128xf32>
    %c0_7 = arith.constant 0 : index
    %c0_8 = arith.constant 0 : index
    %8 = vector.load %arg4[%c0_7, %c0_8] : memref<2x1xf32, #tpu.memory_space<vmem>>, vector<2x1xf32>
    %9 = vector.broadcast %8 : vector<2x1xf32> to vector<2x128xf32>
    %10 = arith.addf %7, %9 : vector<2x128xf32>
    %c0_9 = arith.constant 0 : index
    %c0_10 = arith.constant 0 : index
    %11 = vector.load %arg5[%c0_9, %c0_10] : memref<2x128xf32, #tpu.memory_space<vmem>>, vector<2x128xf32>
    tpu.vector_store %arg5[%c0_9, %c0_10], %10 {strides = array<i32>} : memref<2x128xf32, #tpu.memory_space<vmem>>, vector<2x128xf32>,
    return
  }
  func.func @transform_0(%arg0: i32) -> (i32, i32) {
    %c0_i32 = arith.constant 0 : i32
    %c0_i32_0 = arith.constant 0 : i32
    return %c0_i32, %arg0 : i32, i32
  }
  func.func @transform_1(%arg0: i32) -> (i32, i32) {
    %c0_i32 = arith.constant 0 : i32
    %c0_i32_0 = arith.constant 0 : i32
    %c0_i32_1 = arith.constant 0 : i32
    return %c0_i32, %c0_i32_0 : i32, i32
  }
  func.func @transform_2(%arg0: i32) -> (i32, i32) {
    %c0_i32 = arith.constant 0 : i32
    %c0_i32_0 = arith.constant 0 : i32
    %c0_i32_1 = arith.constant 0 : i32
    return %c0_i32, %c0_i32_0 : i32, i32
  }
  func.func @transform_3(%arg0: i32) -> (i32, i32) {
    %c0_i32 = arith.constant 0 : i32
    %c0_i32_0 = arith.constant 0 : i32
    %c0_i32_1 = arith.constant 0 : i32
    return %c0_i32, %c0_i32_0 : i32, i32
  }
  func.func @transform_4(%arg0: i32) -> (i32, i32) {
    %c0_i32 = arith.constant 0 : i32
    %c0_i32_0 = arith.constant 0 : i32
    return %c0_i32, %arg0 : i32, i32
  }
}

</mosaic_0001>

<llo_original>
// kernel: fc_net_forward.1
$region0: #{fc_net_forward.1}
  #allocation0 [shape = 'u32[]', space=smem, size = 0x4, offset = 0x4, fixed_abs, tag = 'smem constant byte address 0x4 - core index']
  #allocation1 [shape = 'u32[144,128]{1,0:T(1,128)}', space=vmem, size = 0x12000, scoped, tag = 'internal scratch']
  %s0 = inlined_call_operand.vmem [shape: bf16[5,128], index: 0, kind: input, shape index: {}]
  %s1 = inlined_call_operand.vmem [shape: bf16[32,5], index: 1, kind: input, shape index: {}]
  %s2 = inlined_call_operand.vmem [shape: bf16[2,32], index: 2, kind: input, shape index: {}]
  %s3 = inlined_call_operand.vmem [shape: f32[2,1], index: 3, kind: input, shape index: {}]
  %s4 = inlined_call_operand.vmem [shape: f32[2,128], index: 4, kind: output, shape index: {}]
  %s5 = sld [smem:[#allocation0]]
  $region26: #{fc_net_forward.1} parent=0
    _
  %s7 = ssub.s32 1, %s5
  %s8 = scalar_select 0, %s7, %s5
  // Predicated region
  $region2: #{fc_net_forward.1} parent=0 // pred_check
    _
  $region3: #{fc_net_forward.1} parent=0 // pred_check_branch
    %10 = sbr.rel (0) target = $region5
  $region4: #{fc_net_forward.1} parent=0 // pred_region
    _
  $region5: #{fc_net_forward.1} parent=0 // pred_fallthru
    _
  // Predicated region
  $region6: #{fc_net_forward.1} parent=0 // pred_check
    _
  $region7: #{fc_net_forward.1} parent=0 // pred_check_branch
    %12 = sbr.rel (0) target = $region9
  $region8: #{fc_net_forward.1} parent=0 // pred_region
    _
  $region9: #{fc_net_forward.1} parent=0 // pred_fallthru
    _
  // Predicated region
  $region10: #{fc_net_forward.1} parent=0 // pred_check
    _
  $region11: #{fc_net_forward.1} parent=0 // pred_check_branch
    %14 = sbr.rel (0) target = $region13
  $region12: #{fc_net_forward.1} parent=0 // pred_region
    _
  $region13: #{fc_net_forward.1} parent=0 // pred_fallthru
    _
  // Predicated region
  $region14: #{fc_net_forward.1} parent=0 // pred_check
    _
  $region15: #{fc_net_forward.1} parent=0 // pred_check_branch
    %16 = sbr.rel (0) target = $region17
  $region16: #{fc_net_forward.1} parent=0 // pred_region
    _
  $region17: #{fc_net_forward.1} parent=0 // pred_fallthru
    _
  %v18 = vld [vmem:[%s1] sm:$0xf]
  %v19 = vld [vmem:[%s1 + $0x4] sm:$0xf]
  %v20 = vld [vmem:[%s1 + $0x8] sm:$0xf]
  %v21 = vld [vmem:[%s1 + $0xc] sm:$0xf]
  %v22 = vld [vmem:[%s0] sm:$0x7]
  %v27 = vunpack.c.l.b16 %v18
  %v28 = vunpack.c.l.b16 %v19
  %v29 = vunpack.c.l.b16 %v20
  %v30 = vunpack.c.l.b16 %v21
  %v31 = vpack.c.b16 %v28, %v27
  %v32 = vpack.c.b16 %v30, %v29
  %vm33 = vcmask 39936
  %v35 = vsel %vm33, %v31, 0
  %v38 = vsel %vm33, %v32, 0
  %vm40 = vcmask 1041408
  %vm41 = vcmask 1042432
  %v42 = vsel %vm40, 4294967295, 65535
  %v43 = vsel %vm41, %v42, 0
  %v45 = vand.u32 %v22, %v43
  %47 = vmatprep.subr.bf16.mxu0 0
  %48 = vmatpush1.bf16.msra.mxu0 0
  %49 = vmatprep.subr.bf16.mxu0 0
  %50 = vmatpush1.bf16.msra.mxu0 0
  %51 = vmatprep.subr.bf16.mxu0 0
  %52 = vmatpush1.bf16.msra.mxu0 0
  %53 = vmatprep.subr.bf16.mxu0 0
  %54 = vmatpush1.bf16.msra.mxu0 0
  %55 = vmatprep.subr.bf16.mxu0 0
  %56 = vmatpush1.bf16.msra.mxu0 0
  %57 = vmatprep.subr.bf16.mxu0 0
  %58 = vmatpush1.bf16.msra.mxu0 0
  %59 = vmatprep.subr.bf16.mxu0 0
  %60 = vmatpush1.bf16.msra.mxu0 0
  %61 = vmatprep.subr.bf16.mxu0 0
  %62 = vmatpush1.bf16.msra.mxu0 %v45
  %63 = vmatprep.subr.bf16.mxu0 0
  %64 = vmatpush2.bf16.msra.mxu0 0
  %65 = vmatprep.subr.bf16.mxu0 0
  %66 = vmatpush2.bf16.msra.mxu0 0
  %67 = vmatprep.subr.bf16.mxu0 0
  %68 = vmatpush2.bf16.msra.mxu0 0
  %69 = vmatprep.subr.bf16.mxu0 0
  %70 = vmatpush2.bf16.msra.mxu0 0
  %71 = vmatprep.subr.bf16.mxu0 0
  %72 = vmatpush2.bf16.msra.mxu0 0
  %73 = vmatprep.subr.bf16.mxu0 0
  %74 = vmatpush2.bf16.msra.mxu0 0
  %75 = vmatprep.subr.bf16.mxu0 0
  %76 = vmatpush2.bf16.msra.mxu0 0
  %77 = vmatprep.subr.bf16.mxu0 0
  %78 = vmatpush2.bf16.msra.mxu0 0
  %79 = vmatprep.mubr.bf16.mxu0 0
  %80 = vmatmul.mubr.bf16.gmra.mxu0 %v35
  %v81 = vpop.f32.mrf.mxu0
  %v82 = vadd.f32 0.0, %v81
  %v83 = vpop.f32.mrf.mxu0
  %v84 = vpop.f32.mrf.mxu0
  %v85 = vadd.f32 0.0, %v84
  %v86 = vpop.f32.mrf.mxu0
  %87 = vmatprep.mubr.bf16.mxu0 0
  %88 = vmatmul.mubr.bf16.gmra.mxu0 %v38
  %v89 = vpop.f32.mrf.mxu0
  %v90 = vadd.f32 0.0, %v89
  %v91 = vpop.f32.mrf.mxu0
  %v92 = vpop.f32.mrf.mxu0
  %v93 = vadd.f32 0.0, %v92
  %v94 = vpop.f32.mrf.mxu0
  %95 = vdwg.mxu0
  %v96 = vmax.f32 %v82, 0.0
  %v97 = vmax.f32 %v85, 0.0
  %v98 = vmax.f32 %v90, 0.0
  %v99 = vmax.f32 %v93, 0.0
  %v100 = vld [vmem:[%s2] sm:$0x1]
  %v101 = vpack.c.bf16 %v97, %v96
  %v102 = vpack.c.bf16 %v99, %v98
  %v103 = vld [vmem:[%s3] sm:$0x3]
  %105 = vset.pattern.permute.xlu0 0
  %106 = vperm.xlu0 %105, %v103
  %v107 = vpop.permute.xlu0 %106
  %vm109 = vcmask 261120
  %v111 = vsel %vm109, %v100, 0
  %113 = vmatprep.subr.bf16.mxu0 0
  %114 = vmatpush1.bf16.msra.mxu0 0
  %115 = vmatprep.subr.bf16.mxu0 0
  %116 = vmatpush1.bf16.msra.mxu0 0
  %117 = vmatprep.subr.bf16.mxu0 0
  %118 = vmatpush1.bf16.msra.mxu0 0
  %119 = vmatprep.subr.bf16.mxu0 0
  %120 = vmatpush1.bf16.msra.mxu0 0
  %121 = vmatprep.subr.bf16.mxu0 0
  %122 = vmatpush1.bf16.msra.mxu0 0
  %123 = vmatprep.subr.bf16.mxu0 0
  %124 = vmatpush1.bf16.msra.mxu0 0
  %125 = vmatprep.subr.bf16.mxu0 0
  %126 = vmatpush1.bf16.msra.mxu0 %v102
  %127 = vmatprep.subr.bf16.mxu0 0
  %128 = vmatpush1.bf16.msra.mxu0 %v101
  %129 = vmatprep.subr.bf16.mxu0 0
  %130 = vmatpush2.bf16.msra.mxu0 0
  %131 = vmatprep.subr.bf16.mxu0 0
  %132 = vmatpush2.bf16.msra.mxu0 0
  %133 = vmatprep.subr.bf16.mxu0 0
  %134 = vmatpush2.bf16.msra.mxu0 0
  %135 = vmatprep.subr.bf16.mxu0 0
  %136 = vmatpush2.bf16.msra.mxu0 0
  %137 = vmatprep.subr.bf16.mxu0 0
  %138 = vmatpush2.bf16.msra.mxu0 0
  %139 = vmatprep.subr.bf16.mxu0 0
  %140 = vmatpush2.bf16.msra.mxu0 0
  %141 = vmatprep.subr.bf16.mxu0 0
  %142 = vmatpush2.bf16.msra.mxu0 0
  %143 = vmatprep.subr.bf16.mxu0 0
  %144 = vmatpush2.bf16.msra.mxu0 0
  %145 = vmatprep.mubr.bf16.mxu0 0
  %146 = vmatmul.mubr.bf16.gmra.mxu0 %v111
  %v147 = vpop.f32.mrf.mxu0
  %v148 = vadd.f32 %v107, %v147
  %v149 = vpop.f32.mrf.mxu0
  %v150 = vpop.f32.mrf.mxu0
  %v151 = vpop.f32.mrf.mxu0
  %152 = vdwg.mxu0
  %153 = vst [vmem:[%s4] sm:$0x3] %v148
  // Predicated region
  $region18: #{fc_net_forward.1} parent=0 // pred_check
    _
  $region19: #{fc_net_forward.1} parent=0 // pred_check_branch
    %155 = sbr.rel (0) target = $region21
  $region20: #{fc_net_forward.1} parent=0 // pred_region
    _
  $region21: #{fc_net_forward.1} parent=0 // pred_fallthru
    _
  // Predicated region
  $region22: #{fc_net_forward.1} parent=0 // pred_check
    _
  $region23: #{fc_net_forward.1} parent=0 // pred_check_branch
    %157 = sbr.rel (0) target = $region25
  $region24: #{fc_net_forward.1} parent=0 // pred_region
    _
  $region25: #{fc_net_forward.1} parent=0 // pred_fallthru
    _

</llo_original>
